<compile_context>
chip_gen: v7x
topology: tpu7x:2x2x1
jax: 0.10.0
libtpu: 0.0.40
codegen_flags: <defaults>
</compile_context>

<pallas_src>
import functools

import jax
import jax.numpy as jnp
from jax.experimental import pallas as pl
from jax.experimental.pallas import tpu as pltpu

_LANES = 128
_SUBLANES = 8
_MAX_BLOCK_ROWS = 4096   # (4096,128) f32 = 2 MiB/buffer; 2 inputs x 2 bufs = 8 MiB VMEM
_CHUNK_ROWS = 512        # in-kernel compute chunk -> bounded elementwise temporaries
_PAD_LOGIT = -1.0e4      # tanh saturates -> p == 0, log-term == 0: masked rows add exactly 0


def _cdiv(a, b):
    return (a + b - 1) // b


def _round_up(a, b):
    return _cdiv(a, b) * b


def _num_tensorcores():
    """2-way split only on 2-TensorCore chips (v7x); 1 elsewhere (v5e/v6e are single-TC)."""
    try:
        kind = jax.devices()[0].device_kind.lower()
    except Exception:
        return 1
    return 2 if "v7" in kind else 1


def _chunk_partials(x, t, valid):
    """Per-chunk (rows,128) -> four (8,128) lane/sublane-wise partial sums.

    Order: (bce_terms, sigmoid(x)*t, sigmoid(x), t). Only 2 EUP ops/element (tanh, log).
    """
    if valid is not None:
        # Mask BEFORE any math so stale/garbage OOB data can never propagate (NaN-safe).
        x = jnp.where(valid, x, _PAD_LOGIT)
        t = jnp.where(valid, t, 0.0)

    p = 0.5 * (1.0 + jnp.tanh(0.5 * x))                      # sigmoid(x), 1 EUP op
    # log1p(exp(-|x|)) == -log(sigmoid(|x|)) == -log(where(x>=0, p, 1-p))  -> reuse p
    bce = jnp.maximum(x, 0.0) - x * t - jnp.log(jnp.where(x >= 0.0, p, 1.0 - p))

    rows = x.shape[0]

    def fold(v):
        # (rows,128) -> (8,128): pure VPU adds, no cross-lane XLU work.
        return v.reshape(rows // _SUBLANES, _SUBLANES, _LANES).sum(axis=0)

    return fold(bce), fold(p * t), fold(p), fold(t)


def _bce_dice_sums_kernel(x_ref, t_ref, out_ref, *, block_rows, chunk_rows, n_chunks,
                          steps_per_split, rows_valid, need_mask):
    """Accumulate lane/sublane-wise partial sums of the 4 reduction quantities.

    out_ref: (1, 4, 8, 128) f32 block, resident across the reduction grid axis (axis 1).
      row 0: per-element BCE-with-logits terms
      row 1: sigmoid(x) * t   (dice intersection)
      row 2: sigmoid(x)       (dice preds sum)
      row 3: t                (dice targets sum)
    """
    @pl.when(pl.program_id(1) == 0)
    def _init():
        out_ref[...] = jnp.zeros_like(out_ref)

    if need_mask:
        # Logical (unclamped) first row of this block; rows >= rows_valid contribute 0.
        block_row0 = (pl.program_id(0) * steps_per_split + pl.program_id(1)) * block_rows
        row_iota = jax.lax.broadcasted_iota(jnp.int32, (chunk_rows, _LANES), 0)  # hoisted

    def chunk_sums(r0):
        x = x_ref[pl.ds(r0, chunk_rows), :].astype(jnp.float32)
        t = t_ref[pl.ds(r0, chunk_rows), :].astype(jnp.float32)
        valid = ((block_row0 + r0 + row_iota) < rows_valid) if need_mask else None
        return _chunk_partials(x, t, valid)

    if n_chunks == 1:
        bce_s, pt_s, p_s, t_s = chunk_sums(0)
    else:
        def body(i, carry):
            r0 = pl.multiple_of(i * chunk_rows, chunk_rows)
            return tuple(a + b for a, b in zip(carry, chunk_sums(r0)))

        zeros = jnp.zeros((_SUBLANES, _LANES), jnp.float32)
        bce_s, pt_s, p_s, t_s = jax.lax.fori_loop(
            0, n_chunks, body, (zeros, zeros, zeros, zeros), unroll=True)

    out_ref[0, 0] += bce_s
    out_ref[0, 1] += pt_s
    out_ref[0, 2] += p_s
    out_ref[0, 3] += t_s


def _run_sums(x2d, t2d, *, block_rows, chunk_rows, n_chunks, steps, num_splits,
              total_blocks, rows_valid, need_mask):
    kernel = functools.partial(
        _bce_dice_sums_kernel,
        block_rows=block_rows, chunk_rows=chunk_rows, n_chunks=n_chunks,
        steps_per_split=steps, rows_valid=rows_valid, need_mask=need_mask)

    if steps * num_splits == total_blocks:
        in_map = lambda c, k: (c * steps + k, 0)
    else:
        # Clamp duplicated trailing blocks in-bounds; they are fully masked in-kernel.
        last_block = total_blocks - 1
        in_map = lambda c, k: (jnp.minimum(c * steps + k, last_block), 0)

    in_blk = pl.BlockSpec((block_rows, _LANES), in_map)
    out_blk = pl.BlockSpec((1, 4, _SUBLANES, _LANES), lambda c, k: (c, 0, 0, 0))

    n_elems = rows_valid * _LANES
    bytes_accessed = int(
        rows_valid * _LANES * (x2d.dtype.itemsize + t2d.dtype.itemsize)
        + num_splits * 4 * _SUBLANES * _LANES * 4)

    return pl.pallas_call(
        kernel,
        out_shape=jax.ShapeDtypeStruct((num_splits, 4, _SUBLANES, _LANES), jnp.float32),
        grid_spec=pltpu.PrefetchScalarGridSpec(
            num_scalar_prefetch=0,
            grid=(num_splits, steps),
            in_specs=[in_blk, in_blk],
            out_specs=out_blk,
        ),
        compiler_params=pltpu.CompilerParams(
            dimension_semantics=("parallel", "arbitrary"),
        ),
        cost_estimate=pl.CostEstimate(
            flops=16 * n_elems,
            transcendentals=2 * n_elems,
            bytes_accessed=bytes_accessed,
        ),
    )(x2d, t2d)


@functools.partial(jax.jit, static_argnames=("alpha",))
def bce_dice_loss(logits, targets, alpha=0.5):
    """alpha * BCEWithLogitsLoss(logits, targets) + (1 - alpha) * (1 - dice(sigmoid(logits), targets))."""
    smooth = 1e-07
    n = logits.size

    x = logits.reshape(-1)
    t = targets.reshape(-1)

    # Split off the sub-128-element tail (rare) so the main body reshapes to (rows, 128)
    # with no data movement (pure bitcast) — no full-array jnp.pad round trip.
    n_main = (n // _LANES) * _LANES
    tail = n - n_main

    tail_sums = None
    if tail:
        xt = x[n_main:].astype(jnp.float32)
        tt = t[n_main:].astype(jnp.float32)
        pt = jax.nn.sigmoid(xt)
        bce_t = jnp.maximum(xt, 0.0) - xt * tt + jnp.log1p(jnp.exp(-jnp.abs(xt)))
        tail_sums = jnp.stack([bce_t.sum(), (pt * tt).sum(), pt.sum(), tt.sum()])

    if n_main > 0:
        rows = n_main // _LANES
        # Keep block/chunk rows a multiple of the packed sublane tile (8 f32 / 16 bf16 / 32 int8).
        itemsize = min(logits.dtype.itemsize, targets.dtype.itemsize)
        align = _SUBLANES * max(1, 4 // max(1, itemsize))

        if rows <= _CHUNK_ROWS:
            block_rows = _round_up(rows, align)      # single small block, no chunk loop
            chunk_rows = block_rows
        else:
            block_rows = min(_MAX_BLOCK_ROWS, _round_up(rows, _CHUNK_ROWS))
            chunk_rows = _CHUNK_ROWS
        n_chunks = block_rows // chunk_rows

        total_blocks = _cdiv(rows, block_rows)
        num_splits = max(1, min(_num_tensorcores(), total_blocks))
        steps = _cdiv(total_blocks, num_splits)
        need_mask = (rows % block_rows != 0) or (steps * num_splits != total_blocks)

        # Only copies on non-128-aligned sizes; otherwise the reshape is a pure bitcast.
        x_main = x[:n_main] if tail else x
        t_main = t[:n_main] if tail else t
        x2d = x_main.reshape(rows, _LANES)
        t2d = t_main.reshape(rows, _LANES)

        parts = _run_sums(x2d, t2d, block_rows=block_rows, chunk_rows=chunk_rows,
                          n_chunks=n_chunks, steps=steps, num_splits=num_splits,
                          total_blocks=total_blocks, rows_valid=rows, need_mask=need_mask)
        sums = parts.sum(axis=(0, 2, 3))             # (4,) tiny epilogue reduction in XLA
    else:
        sums = jnp.zeros((4,), jnp.float32)

    if tail_sums is not None:
        sums = sums + tail_sums

    bce_sum, inter, p_sum, t_sum = sums[0], sums[1], sums[2], sums[3]

    bce_loss = bce_sum / jnp.float32(n)              # BCEWithLogitsLoss reduction='mean'
    dice_score = (2.0 * inter + smooth) / (p_sum + t_sum + smooth)
    dice_loss = 1.0 - dice_score
    return alpha * bce_loss + (1.0 - alpha) * dice_loss


if __name__ == "__main__":
    key = jax.random.PRNGKey(0)
    k1, k2 = jax.random.split(key)
    # NCHW: batch=2, channels=4, spatial=16x16
    logits = jax.random.normal(k1, (2, 4, 16, 16), dtype=jnp.float32)
    targets = (jax.random.uniform(k2, (2, 4, 16, 16)) > 0.5).astype(jnp.float32)

    loss = bce_dice_loss(logits, targets, alpha=0.5)
    jax.block_until_ready(loss)

    # Pure-JAX reference check
    x = logits.reshape(-1)
    t = targets.reshape(-1)
    bce_ref = jnp.mean(jnp.maximum(x, 0.0) - x * t + jnp.log1p(jnp.exp(-jnp.abs(x))))
    p = jax.nn.sigmoid(x)
    dice_ref = (2.0 * jnp.sum(p * t) + 1e-07) / (jnp.sum(p) + jnp.sum(t) + 1e-07)
    ref = 0.5 * bce_ref + 0.5 * (1.0 - dice_ref)
    assert jnp.allclose(loss, ref, rtol=2e-4, atol=1e-5), (loss, ref)

    print("KERNEL_OK")
</pallas_src>

<mosaic_0001>
module attributes {stable_mosaic.version = 11 : i64} {
  func.func @_bce_dice_sums_kernel(%arg0: i32, %arg1: i32, %arg2: memref<16x128xf32, #tpu.memory_space<vmem>>, %arg3: memref<16x128xf32, #tpu.memory_space<vmem>>, %arg4: memref<1x4x8x128xf32, #tpu.memory_space<vmem>>) attributes {dimension_semantics = [#tpu.dimension_semantics<parallel>, #tpu.dimension_semantics<arbitrary>], iteration_bounds = array<i64: 1, 1>, scalar_prefetch = 0 : i64, scratch_operands = 0 : i64, tpu.core_type = #tpu.core_type<tc>, window_params = [{transform_indices = @transform_0, window_bounds = array<i64: 16, 128>}, {transform_indices = @transform_1, window_bounds = array<i64: 16, 128>}, {transform_indices = @transform_2, window_bounds = array<i64: 1, 4, 8, 128>}]} {
    %c0_i32 = arith.constant 0 : i32
    %0 = arith.cmpi eq, %arg1, %c0_i32 : i32
    %1 = arith.extui %0 : i1 to i32
    %c0_i32_0 = arith.constant 0 : i32
    %2 = arith.cmpi ne, %1, %c0_i32_0 : i32
    scf.if %2 {
      %cst_42 = arith.constant 0.000000e+00 : f32
      %56 = vector.broadcast %cst_42 : f32 to vector<1x4x8x128xf32>
      %c0_43 = arith.constant 0 : index
      %c0_44 = arith.constant 0 : index
      %c0_45 = arith.constant 0 : index
      %c0_46 = arith.constant 0 : index
      %57 = vector.load %arg4[%c0_43, %c0_44, %c0_45, %c0_46] : memref<1x4x8x128xf32, #tpu.memory_space<vmem>>, vector<1x4x8x128xf32>
      tpu.vector_store %arg4[%c0_43, %c0_44, %c0_45, %c0_46], %56 {strides = array<i32>} : memref<1x4x8x128xf32, #tpu.memory_space<vmem>>, vector<1x4x8x128xf32>,
    } else {
    }
    %c0 = arith.constant 0 : index
    %c0_1 = arith.constant 0 : index
    %3 = vector.load %arg2[%c0, %c0_1] : memref<16x128xf32, #tpu.memory_space<vmem>>, vector<16x128xf32>
    %c0_2 = arith.constant 0 : index
    %c0_3 = arith.constant 0 : index
    %4 = vector.load %arg3[%c0_2, %c0_3] : memref<16x128xf32, #tpu.memory_space<vmem>>, vector<16x128xf32>
    %cst = arith.constant 5.000000e-01 : f32
    %5 = vector.broadcast %cst : f32 to vector<16x128xf32>
    %6 = arith.mulf %5, %3 : vector<16x128xf32>
    %7 = math.tanh %6 : vector<16x128xf32>
    %cst_4 = arith.constant 1.000000e+00 : f32
    %8 = vector.broadcast %cst_4 : f32 to vector<16x128xf32>
    %9 = arith.addf %8, %7 : vector<16x128xf32>
    %cst_5 = arith.constant 5.000000e-01 : f32
    %10 = vector.broadcast %cst_5 : f32 to vector<16x128xf32>
    %11 = arith.mulf %10, %9 : vector<16x128xf32>
    %cst_6 = arith.constant 0.000000e+00 : f32
    %12 = vector.broadcast %cst_6 : f32 to vector<16x128xf32>
    %13 = arith.maximumf %3, %12 : vector<16x128xf32>
    %14 = arith.mulf %3, %4 : vector<16x128xf32>
    %15 = arith.subf %13, %14 : vector<16x128xf32>
    %cst_7 = arith.constant 0.000000e+00 : f32
    %16 = vector.broadcast %cst_7 : f32 to vector<16x128xf32>
    %17 = arith.cmpf oge, %3, %16 : vector<16x128xf32>
    %cst_8 = arith.constant 1.000000e+00 : f32
    %18 = vector.broadcast %cst_8 : f32 to vector<16x128xf32>
    %19 = arith.subf %18, %11 : vector<16x128xf32>
    %20 = arith.select %17, %11, %19 : vector<16x128xi1>, vector<16x128xf32>
    %21 = math.log %20 : vector<16x128xf32>
    %22 = arith.subf %15, %21 : vector<16x128xf32>
    %23 = vector.shape_cast %22 : vector<16x128xf32> to vector<2x8x128xf32>
    %cst_9 = arith.constant dense<0.000000e+00> : vector<8x128xf32>
    %24 = vector.multi_reduction <add>, %23, %cst_9 [0] : vector<2x8x128xf32> to vector<8x128xf32>
    %25 = arith.mulf %11, %4 : vector<16x128xf32>
    %26 = vector.shape_cast %25 : vector<16x128xf32> to vector<2x8x128xf32>
    %cst_10 = arith.constant dense<0.000000e+00> : vector<8x128xf32>
    %27 = vector.multi_reduction <add>, %26, %cst_10 [0] : vector<2x8x128xf32> to vector<8x128xf32>
    %28 = vector.shape_cast %11 : vector<16x128xf32> to vector<2x8x128xf32>
    %cst_11 = arith.constant dense<0.000000e+00> : vector<8x128xf32>
    %29 = vector.multi_reduction <add>, %28, %cst_11 [0] : vector<2x8x128xf32> to vector<8x128xf32>
    %30 = vector.shape_cast %4 : vector<16x128xf32> to vector<2x8x128xf32>
    %cst_12 = arith.constant dense<0.000000e+00> : vector<8x128xf32>
    %31 = vector.multi_reduction <add>, %30, %cst_12 [0] : vector<2x8x128xf32> to vector<8x128xf32>
    %c0_13 = arith.constant 0 : index
    %c0_14 = arith.constant 0 : index
    %c0_15 = arith.constant 0 : index
    %c0_16 = arith.constant 0 : index
    %32 = vector.load %arg4[%c0_13, %c0_14, %c0_15, %c0_16] : memref<1x4x8x128xf32, #tpu.memory_space<vmem>>, vector<1x1x8x128xf32>
    %33 = vector.shape_cast %32 : vector<1x1x8x128xf32> to vector<8x128xf32>
    %34 = arith.addf %33, %24 : vector<8x128xf32>
    %c0_17 = arith.constant 0 : index
    %c0_18 = arith.constant 0 : index
    %c0_19 = arith.constant 0 : index
    %c0_20 = arith.constant 0 : index
    %35 = vector.load %arg4[%c0_17, %c0_18, %c0_19, %c0_20] : memref<1x4x8x128xf32, #tpu.memory_space<vmem>>, vector<1x1x8x128xf32>
    %36 = vector.shape_cast %35 : vector<1x1x8x128xf32> to vector<8x128xf32>
    %37 = vector.shape_cast %34 : vector<8x128xf32> to vector<1x1x8x128xf32>
    tpu.vector_store %arg4[%c0_17, %c0_18, %c0_19, %c0_20], %37 {strides = array<i32>} : memref<1x4x8x128xf32, #tpu.memory_space<vmem>>, vector<1x1x8x128xf32>,
    %c0_21 = arith.constant 0 : index
    %c1 = arith.constant 1 : index
    %c0_22 = arith.constant 0 : index
    %c0_23 = arith.constant 0 : index
    %38 = vector.load %arg4[%c0_21, %c1, %c0_22, %c0_23] : memref<1x4x8x128xf32, #tpu.memory_space<vmem>>, vector<1x1x8x128xf32>
    %39 = vector.shape_cast %38 : vector<1x1x8x128xf32> to vector<8x128xf32>
    %40 = arith.addf %39, %27 : vector<8x128xf32>
    %c0_24 = arith.constant 0 : index
    %c1_25 = arith.constant 1 : index
    %c0_26 = arith.constant 0 : index
    %c0_27 = arith.constant 0 : index
    %41 = vector.load %arg4[%c0_24, %c1_25, %c0_26, %c0_27] : memref<1x4x8x128xf32, #tpu.memory_space<vmem>>, vector<1x1x8x128xf32>
    %42 = vector.shape_cast %41 : vector<1x1x8x128xf32> to vector<8x128xf32>
    %43 = vector.shape_cast %40 : vector<8x128xf32> to vector<1x1x8x128xf32>
    tpu.vector_store %arg4[%c0_24, %c1_25, %c0_26, %c0_27], %43 {strides = array<i32>} : memref<1x4x8x128xf32, #tpu.memory_space<vmem>>, vector<1x1x8x128xf32>,
    %c0_28 = arith.constant 0 : index
    %c2 = arith.constant 2 : index
    %c0_29 = arith.constant 0 : index
    %c0_30 = arith.constant 0 : index
    %44 = vector.load %arg4[%c0_28, %c2, %c0_29, %c0_30] : memref<1x4x8x128xf32, #tpu.memory_space<vmem>>, vector<1x1x8x128xf32>
    %45 = vector.shape_cast %44 : vector<1x1x8x128xf32> to vector<8x128xf32>
    %46 = arith.addf %45, %29 : vector<8x128xf32>
    %c0_31 = arith.constant 0 : index
    %c2_32 = arith.constant 2 : index
    %c0_33 = arith.constant 0 : index
    %c0_34 = arith.constant 0 : index
    %47 = vector.load %arg4[%c0_31, %c2_32, %c0_33, %c0_34] : memref<1x4x8x128xf32, #tpu.memory_space<vmem>>, vector<1x1x8x128xf32>
    %48 = vector.shape_cast %47 : vector<1x1x8x128xf32> to vector<8x128xf32>
    %49 = vector.shape_cast %46 : vector<8x128xf32> to vector<1x1x8x128xf32>
    tpu.vector_store %arg4[%c0_31, %c2_32, %c0_33, %c0_34], %49 {strides = array<i32>} : memref<1x4x8x128xf32, #tpu.memory_space<vmem>>, vector<1x1x8x128xf32>,
    %c0_35 = arith.constant 0 : index
    %c3 = arith.constant 3 : index
    %c0_36 = arith.constant 0 : index
    %c0_37 = arith.constant 0 : index
    %50 = vector.load %arg4[%c0_35, %c3, %c0_36, %c0_37] : memref<1x4x8x128xf32, #tpu.memory_space<vmem>>, vector<1x1x8x128xf32>
    %51 = vector.shape_cast %50 : vector<1x1x8x128xf32> to vector<8x128xf32>
    %52 = arith.addf %51, %31 : vector<8x128xf32>
    %c0_38 = arith.constant 0 : index
    %c3_39 = arith.constant 3 : index
    %c0_40 = arith.constant 0 : index
    %c0_41 = arith.constant 0 : index
    %53 = vector.load %arg4[%c0_38, %c3_39, %c0_40, %c0_41] : memref<1x4x8x128xf32, #tpu.memory_space<vmem>>, vector<1x1x8x128xf32>
    %54 = vector.shape_cast %53 : vector<1x1x8x128xf32> to vector<8x128xf32>
    %55 = vector.shape_cast %52 : vector<8x128xf32> to vector<1x1x8x128xf32>
    tpu.vector_store %arg4[%c0_38, %c3_39, %c0_40, %c0_41], %55 {strides = array<i32>} : memref<1x4x8x128xf32, #tpu.memory_space<vmem>>, vector<1x1x8x128xf32>,
    return
  }
  func.func @transform_0(%arg0: i32, %arg1: i32) -> (i32, i32) {
    %c1_i32 = arith.constant 1 : i32
    %0 = arith.muli %arg0, %c1_i32 : i32
    %1 = arith.addi %0, %arg1 : i32
    %c0_i32 = arith.constant 0 : i32
    %c0_i32_0 = arith.constant 0 : i32
    return %1, %c0_i32 : i32, i32
  }
  func.func @transform_1(%arg0: i32, %arg1: i32) -> (i32, i32) {
    %c1_i32 = arith.constant 1 : i32
    %0 = arith.muli %arg0, %c1_i32 : i32
    %1 = arith.addi %0, %arg1 : i32
    %c0_i32 = arith.constant 0 : i32
    %c0_i32_0 = arith.constant 0 : i32
    return %1, %c0_i32 : i32, i32
  }
  func.func @transform_2(%arg0: i32, %arg1: i32) -> (i32, i32, i32, i32) {
    %c0_i32 = arith.constant 0 : i32
    %c0_i32_0 = arith.constant 0 : i32
    %c0_i32_1 = arith.constant 0 : i32
    %c0_i32_2 = arith.constant 0 : i32
    return %arg0, %c0_i32, %c0_i32_0, %c0_i32_1 : i32, i32, i32, i32
  }
}

</mosaic_0001>

<llo_original>
// kernel: bce_dice_loss.1
$region0: #{bce_dice_loss.1}
  #allocation0 [shape = 'u32[]', space=smem, size = 0x4, offset = 0x4, fixed_abs, tag = 'smem constant byte address 0x4 - core index']
  #allocation1 [shape = 'u32[144,128]{1,0:T(1,128)}', space=vmem, size = 0x12000, scoped, tag = 'internal scratch']
  %s0 = inlined_call_operand.vmem [shape: f32[16,128], index: 0, kind: input, shape index: {}]
  %s1 = inlined_call_operand.vmem [shape: f32[16,128], index: 1, kind: input, shape index: {}]
  %s2 = inlined_call_operand.vmem [shape: f32[1,4,8,128], index: 2, kind: output, shape index: {}]
  %s3 = sld [smem:[#allocation0]]
  $region22: #{bce_dice_loss.1} parent=0
    _
  %s5 = ssub.s32 1, %s3
  %s6 = scalar_select 0, %s5, %s3
  // Predicated region
  $region2: #{bce_dice_loss.1} parent=0 // pred_check
    _
  $region3: #{bce_dice_loss.1} parent=0 // pred_check_branch
    %8 = sbr.rel (0) target = $region5
  $region4: #{bce_dice_loss.1} parent=0 // pred_region
    %s9 = sadd.s32 0, 0
    %s10 = smul.u32 2, %s9
    %p11 = scmp.lt.s32.totalorder %s10, 1
    %s12 = scalar_select %p11, %s10, 1
    %s13 = smul.addr %s12, 8
    %s14 = scalar_lea.vmem %s0, %s13
    %s15 = sadd.s32 0, 0
    %s16 = smul.u32 2, %s15
  $region5: #{bce_dice_loss.1} parent=0 // pred_fallthru
    _
  // Predicated region
  $region6: #{bce_dice_loss.1} parent=0 // pred_check
    _
  $region7: #{bce_dice_loss.1} parent=0 // pred_check_branch
    %18 = sbr.rel (0) target = $region9
  $region8: #{bce_dice_loss.1} parent=0 // pred_region
    %s19 = sadd.s32 0, 0
    %s20 = smul.u32 2, %s19
    %p21 = scmp.lt.s32.totalorder %s20, 1
    %s22 = scalar_select %p21, %s20, 1
    %s23 = smul.addr %s22, 8
    %s24 = scalar_lea.vmem %s1, %s23
    %s25 = sadd.s32 0, 0
    %s26 = smul.u32 2, %s25
  $region9: #{bce_dice_loss.1} parent=0 // pred_fallthru
    _
  %s27 = sadd.s32 0, 0
  %s28 = smul.u32 2, %s27
  %p29 = scmp.lt.s32.totalorder %s28, 1
  %s30 = scalar_select %p29, %s28, 1
  %s31 = smul.addr %s30, 8
  %s32 = scalar_lea.vmem %s0, %s31
  %s33 = sadd.s32 0, 0
  %s34 = smul.u32 2, %s33
  %p35 = scmp.lt.s32.totalorder %s34, 1
  %s36 = scalar_select %p35, %s34, 1
  %s37 = smul.addr %s36, 8
  %s38 = scalar_lea.vmem %s1, %s37
  %s39 = sadd.s32 0, 0
  %s40 = smul.u32 2, %s39
  %p41 = scmp.lt.s32.totalorder %s40, 1
  %s42 = scalar_select %p41, %s40, 1
  %s43 = smul.addr %s42, 8
  %s44 = scalar_lea.vmem %s0, %s43
  %s45 = sadd.s32 0, 0
  %s46 = smul.u32 2, %s45
  %s47 = sadd.s32 0, 0
  %s48 = smul.u32 2, %s47
  %p49 = scmp.lt.s32.totalorder %s48, 1
  %s50 = scalar_select %p49, %s48, 1
  %s51 = smul.addr %s50, 8
  %s52 = scalar_lea.vmem %s1, %s51
  %s53 = sadd.s32 0, 0
  %s54 = smul.u32 2, %s53
  %p55 = scmp.eq.s32.totalorder 0, 0
  // Predicated region
  $region10: #{bce_dice_loss.1} parent=0 // pred_check
    %p56 = pneg %p55
  $region11: #{bce_dice_loss.1} parent=0 // pred_check_branch
    %58 = sbr.rel (%p56) target = $region13
  $region12: #{bce_dice_loss.1} parent=0 // pred_region
    %59 = vst [vmem:[%s2] sm:$0xff] 0.0
    %60 = vst [vmem:[%s2 + $0x8] sm:$0xff] 0.0
    %61 = vst [vmem:[%s2 + $0x10] sm:$0xff] 0.0
    %62 = vst [vmem:[%s2 + $0x18] sm:$0xff] 0.0
  $region13: #{bce_dice_loss.1} parent=0 // pred_fallthru
    _
  %v63 = vld [vmem:[%s44] sm:$0xff]
  %v64 = vld [vmem:[%s44 + $0x8] sm:$0xff]
  %v65 = vld [vmem:[%s52] sm:$0xff]
  %v66 = vld [vmem:[%s52 + $0x8] sm:$0xff]
  %v67 = vmul.f32 %v63, 0.5
  %v68 = vmul.f32 %v64, 0.5
  %v69 = vtanh.pop %v67
  %v70 = vtanh.pop %v68
  %v71 = vadd.f32 %v69, 1.0
  %v72 = vadd.f32 %v70, 1.0
  %v73 = vmul.f32 %v71, 0.5
  %v74 = vmul.f32 %v72, 0.5
  %v75 = vmax.f32 %v63, 0.0
  %v76 = vmax.f32 %v64, 0.0
  %v77 = vmul.f32 %v63, %v65
  %v78 = vmul.f32 %v64, %v66
  %v79 = vsub.f32 %v75, %v77
  %v80 = vsub.f32 %v76, %v78
  %vm81 = vcmp.ge.f32.partialorder %v63, 0.0
  %vm82 = vcmp.ge.f32.partialorder %v64, 0.0
  %v83 = vsub.f32 1.0, %v73
  %v84 = vsub.f32 1.0, %v74
  %v85 = vsel %vm81, %v73, %v83
  %v86 = vsel %vm82, %v74, %v84
  %v87 = vlog2.pop %v85
  %v88 = vmul.f32 %v87, 0.6931472
  %v89 = vlog2.pop %v86
  %v90 = vmul.f32 %v89, 0.6931472
  %v91 = vsub.f32 %v79, %v88
  %v92 = vsub.f32 %v80, %v90
  %v93 = vadd.f32 %v91, %v92
  %v94 = vmul.f32 %v73, %v65
  %v95 = vmul.f32 %v74, %v66
  %v96 = vadd.f32 %v94, %v95
  %v97 = vadd.f32 %v73, %v74
  %v98 = vadd.f32 %v65, %v66
  %v99 = vld [vmem:[%s2] sm:$0xff]
  %v100 = vadd.f32 %v99, %v93
  %101 = vst [vmem:[%s2] sm:$0xff] %v100
  %s102 = scalar_lea.vmem %s2, 8
  %v103 = vld [vmem:[%s102] sm:$0xff]
  %v104 = vadd.f32 %v103, %v96
  %105 = vst [vmem:[%s102] sm:$0xff] %v104
  %s106 = scalar_lea.vmem %s2, 16
  %v107 = vld [vmem:[%s106] sm:$0xff]
  %v108 = vadd.f32 %v107, %v97
  %109 = vst [vmem:[%s106] sm:$0xff] %v108
  %s110 = scalar_lea.vmem %s2, 24
  %v111 = vld [vmem:[%s110] sm:$0xff]
  %v112 = vadd.f32 %v111, %v98
  %113 = vst [vmem:[%s110] sm:$0xff] %v112
  // Predicated region
  $region14: #{bce_dice_loss.1} parent=0 // pred_check
    _
  $region15: #{bce_dice_loss.1} parent=0 // pred_check_branch
    %115 = sbr.rel (0) target = $region17
  $region16: #{bce_dice_loss.1} parent=0 // pred_region
    _
  $region17: #{bce_dice_loss.1} parent=0 // pred_fallthru
    _
  // Predicated region
  $region18: #{bce_dice_loss.1} parent=0 // pred_check
    _
  $region19: #{bce_dice_loss.1} parent=0 // pred_check_branch
    %117 = sbr.rel (0) target = $region21
  $region20: #{bce_dice_loss.1} parent=0 // pred_region
    _
  $region21: #{bce_dice_loss.1} parent=0 // pred_fallthru
    _

</llo_original>
